<compile_context>
chip_gen: v5e
topology: v5e:2x2
jax: 0.10.0
libtpu: 0.0.40
codegen_flags: <defaults>
</compile_context>

<pallas_src>
import jax
import jax.numpy as jnp
from jax.experimental import pallas as pl
from jax.experimental.pallas import tpu as pltpu


def _round_up(a: int, b: int) -> int:
    return (a + b - 1) // b * b


def _make_adapter_kernel(compute_dtype):
    def adapter_kernel(x_ref, w1_ref, b1_ref, w2_ref, b2_ref, o_ref):
        # x_ref: (tm, D), w1_ref: (D, r_pad), b1_ref: (1, r_pad),
        # w2_ref: (r_pad, D), b2_ref: (1, D), o_ref: (tm, D)
        x = x_ref[...].astype(compute_dtype)
        w1 = w1_ref[...].astype(compute_dtype)
        w2 = w2_ref[...].astype(compute_dtype)

        # Down-projection (MXU, f32 accumulation) + bias + ReLU in f32.
        h = jnp.dot(x, w1, preferred_element_type=jnp.float32) + b1_ref[...]
        h = jnp.maximum(h, 0.0)

        # Up-projection + bias.
        y = jnp.dot(h.astype(compute_dtype), w2,
                    preferred_element_type=jnp.float32) + b2_ref[...]
        o_ref[...] = y.astype(o_ref.dtype)

    return adapter_kernel


def adapter_forward(x, w1, b1, w2, b2, *, tm=512, matmul_dtype=None):
    """Adapter forward pass.

    x : (..., D)
    w1: (D, r), b1: (1, r), w2: (r, D), b2: (1, D)
    tm: row tile (rows per grid step). Large tiles (256-512+) amortize the
        ~0.35us per-grid-step overhead and keep the kernel HBM-bound.
    matmul_dtype: optional dtype for MXU operands (e.g. jnp.bfloat16 on
        v6e/v7x). Defaults to x.dtype (exact f32 match with the PyTorch module).
    """
    D = x.shape[-1]
    r = w1.shape[1]
    orig_shape = x.shape
    itemsize = jnp.dtype(x.dtype).itemsize
    compute_dtype = x.dtype if matmul_dtype is None else matmul_dtype

    # --- Pad the bottleneck r up to a full 128-lane vreg width. Zero-padded
    # W1 columns / b1 entries produce ReLU(0)=0 activations which hit zero rows
    # of the padded W2, so the result is unchanged.
    r_pad = _round_up(max(r, 1), 128)
    if r_pad != r:
        w1 = jnp.pad(w1, ((0, 0), (0, r_pad - r)))
        b1 = jnp.pad(b1, ((0, 0), (0, r_pad - r)))
        w2 = jnp.pad(w2, ((0, r_pad - r), (0, 0)))

    # --- Flatten rows and pad M to a multiple of the (possibly shrunk) tile.
    x2 = x.reshape(-1, D)
    M = x2.shape[0]
    tm_eff = min(tm, _round_up(M, 8))          # small inputs -> small tile
    M_pad = _round_up(M, tm_eff)
    if M_pad != M:
        x2 = jnp.pad(x2, ((0, M_pad - M), (0, 0)))

    grid = (M_pad // tm_eff,)

    # --- VMEM budget: double-buffered x/out tiles + (double-buffered) weights
    # plus slack; clamp so it also fits v7x's 64 MiB physical VMEM.
    tile_bytes = tm_eff * D * itemsize
    weight_bytes = (D * r_pad + r_pad + r_pad * D + D) * itemsize
    vmem_needed = 4 * tile_bytes + 2 * weight_bytes + (8 << 20)
    vmem_limit = int(min(max(vmem_needed, 32 << 20), 96 << 20))

    # --- Advisory cost estimate so XLA schedules around this mem-bound call.
    cost = pl.CostEstimate(
        flops=4 * M_pad * D * r_pad,          # two (M,D)x(D,r) matmuls
        transcendentals=0,
        bytes_accessed=2 * M_pad * D * itemsize + weight_bytes,
    )

    # TODO(synk): weight/bias BlockSpecs could use pipeline_mode=pl.Buffered(1)
    # (they are grid-invariant) to halve their VMEM footprint at very large D.
    out = pl.pallas_call(
        _make_adapter_kernel(compute_dtype),
        out_shape=jax.ShapeDtypeStruct((M_pad, D), x.dtype),
        grid_spec=pltpu.PrefetchScalarGridSpec(
            num_scalar_prefetch=0,
            grid=grid,
            in_specs=[
                pl.BlockSpec((tm_eff, D), lambda i: (i, 0)),   # x row tile
                pl.BlockSpec((D, r_pad), lambda i: (0, 0)),    # W1 (resident)
                pl.BlockSpec((1, r_pad), lambda i: (0, 0)),    # b1 (resident)
                pl.BlockSpec((r_pad, D), lambda i: (0, 0)),    # W2 (resident)
                pl.BlockSpec((1, D), lambda i: (0, 0)),        # b2 (resident)
            ],
            out_specs=pl.BlockSpec((tm_eff, D), lambda i: (i, 0)),
        ),
        compiler_params=pltpu.CompilerParams(
            dimension_semantics=("parallel",),
            vmem_limit_bytes=vmem_limit,
        ),
        cost_estimate=cost,
    )(x2, w1, b1, w2, b2)

    return out[:M].reshape(orig_shape)


def init_adapter_params(key, in_features, reduction_factor):
    """Deterministic init matching nn.Linear shapes (uniform +/- 1/sqrt(fan_in))."""
    r = in_features // reduction_factor
    k1, k2, k3, k4 = jax.random.split(key, 4)
    bound1 = 1.0 / jnp.sqrt(in_features)
    bound2 = 1.0 / jnp.sqrt(max(r, 1))
    # Stored already transposed for x @ W (torch stores (out, in); we use (in, out)).
    w1 = jax.random.uniform(k1, (in_features, r), jnp.float32, -bound1, bound1)
    b1 = jax.random.uniform(k2, (1, r), jnp.float32, -bound1, bound1)
    w2 = jax.random.uniform(k3, (r, in_features), jnp.float32, -bound2, bound2)
    b2 = jax.random.uniform(k4, (1, in_features), jnp.float32, -bound2, bound2)
    return w1, b1, w2, b2


if __name__ == "__main__":
    # Small shapes consistent with the module: features D = in_features,
    # reduction_factor = D so the bottleneck is 1 (matching defaults 768/768).
    B, S, D = 2, 8, 128
    reduction_factor = 128  # bottleneck = D // reduction_factor = 1

    key = jax.random.PRNGKey(0)
    kx, kp = jax.random.split(key)
    x = jax.random.normal(kx, (B, S, D), dtype=jnp.float32)
    w1, b1, w2, b2 = init_adapter_params(kp, D, reduction_factor)

    y = adapter_forward(x, w1, b1, w2, b2)   # default tm=512, auto-shrunk/padded
    y = jax.block_until_ready(y)

    # Reference check in plain JAX (same math as the PyTorch module).
    h_ref = jnp.maximum(x.reshape(-1, D) @ w1 + b1, 0.0)
    y_ref = (h_ref @ w2 + b2).reshape(B, S, D)
    assert y.shape == y_ref.shape
    assert jnp.allclose(y, y_ref, atol=1e-5, rtol=1e-5)

    print("KERNEL_OK")
</pallas_src>

<mosaic_0001>
module attributes {stable_mosaic.version = 11 : i64} {
  func.func @adapter_kernel(%arg0: i32, %arg1: memref<16x128xf32, #tpu.memory_space<vmem>>, %arg2: memref<128x128xf32, #tpu.memory_space<vmem>>, %arg3: memref<1x128xf32, #tpu.memory_space<vmem>>, %arg4: memref<128x128xf32, #tpu.memory_space<vmem>>, %arg5: memref<1x128xf32, #tpu.memory_space<vmem>>, %arg6: memref<16x128xf32, #tpu.memory_space<vmem>>) attributes {dimension_semantics = [#tpu.dimension_semantics<parallel>], iteration_bounds = array<i64: 1>, scalar_prefetch = 0 : i64, scratch_operands = 0 : i64, tpu.core_type = #tpu.core_type<tc>, window_params = [{transform_indices = @transform_0, window_bounds = array<i64: 16, 128>}, {pipeline_mode = #tpu.pipeline_mode<synchronous>, transform_indices = @transform_1, window_bounds = array<i64: 128, 128>}, {pipeline_mode = #tpu.pipeline_mode<synchronous>, transform_indices = @transform_2, window_bounds = array<i64: 1, 128>}, {pipeline_mode = #tpu.pipeline_mode<synchronous>, transform_indices = @transform_3, window_bounds = array<i64: 128, 128>}, {pipeline_mode = #tpu.pipeline_mode<synchronous>, transform_indices = @transform_4, window_bounds = array<i64: 1, 128>}, {transform_indices = @transform_5, window_bounds = array<i64: 16, 128>}]} {
    %c0 = arith.constant 0 : index
    %c0_0 = arith.constant 0 : index
    %0 = vector.load %arg1[%c0, %c0_0] : memref<16x128xf32, #tpu.memory_space<vmem>>, vector<16x128xf32>
    %c0_1 = arith.constant 0 : index
    %c0_2 = arith.constant 0 : index
    %1 = vector.load %arg2[%c0_1, %c0_2] : memref<128x128xf32, #tpu.memory_space<vmem>>, vector<128x128xf32>
    %c0_3 = arith.constant 0 : index
    %c0_4 = arith.constant 0 : index
    %2 = vector.load %arg4[%c0_3, %c0_4] : memref<128x128xf32, #tpu.memory_space<vmem>>, vector<128x128xf32>
    %cst = arith.constant dense<0.000000e+00> : vector<16x128xf32>
    %3 = tpu.matmul %0, %1, %cst {dimension_numbers = #tpu.dot_dimension_numbers<[1], [0], [0], [1], [0, 0, 1, 1], [], []>} : vector<16x128xf32>, vector<128x128xf32>, vector<16x128xf32> -> vector<16x128xf32>
    %c0_5 = arith.constant 0 : index
    %c0_6 = arith.constant 0 : index
    %4 = vector.load %arg3[%c0_5, %c0_6] : memref<1x128xf32, #tpu.memory_space<vmem>>, vector<1x128xf32>
    %5 = vector.broadcast %4 : vector<1x128xf32> to vector<16x128xf32>
    %6 = arith.addf %3, %5 : vector<16x128xf32>
    %cst_7 = arith.constant 0.000000e+00 : f32
    %7 = vector.broadcast %cst_7 : f32 to vector<16x128xf32>
    %8 = arith.maximumf %6, %7 : vector<16x128xf32>
    %cst_8 = arith.constant dense<0.000000e+00> : vector<16x128xf32>
    %9 = tpu.matmul %8, %2, %cst_8 {dimension_numbers = #tpu.dot_dimension_numbers<[1], [0], [0], [1], [0, 0, 1, 1], [], []>} : vector<16x128xf32>, vector<128x128xf32>, vector<16x128xf32> -> vector<16x128xf32>
    %c0_9 = arith.constant 0 : index
    %c0_10 = arith.constant 0 : index
    %10 = vector.load %arg5[%c0_9, %c0_10] : memref<1x128xf32, #tpu.memory_space<vmem>>, vector<1x128xf32>
    %11 = vector.broadcast %10 : vector<1x128xf32> to vector<16x128xf32>
    %12 = arith.addf %9, %11 : vector<16x128xf32>
    %c0_11 = arith.constant 0 : index
    %c0_12 = arith.constant 0 : index
    %13 = vector.load %arg6[%c0_11, %c0_12] : memref<16x128xf32, #tpu.memory_space<vmem>>, vector<16x128xf32>
    tpu.vector_store %arg6[%c0_11, %c0_12], %12 {strides = array<i32>} : memref<16x128xf32, #tpu.memory_space<vmem>>, vector<16x128xf32>,
    return
  }
  func.func @transform_0(%arg0: i32) -> (i32, i32) {
    %c0_i32 = arith.constant 0 : i32
    %c0_i32_0 = arith.constant 0 : i32
    return %arg0, %c0_i32 : i32, i32
  }
  func.func @transform_1(%arg0: i32) -> (i32, i32) {
    %c0_i32 = arith.constant 0 : i32
    %c0_i32_0 = arith.constant 0 : i32
    %c0_i32_1 = arith.constant 0 : i32
    return %c0_i32, %c0_i32_0 : i32, i32
  }
  func.func @transform_2(%arg0: i32) -> (i32, i32) {
    %c0_i32 = arith.constant 0 : i32
    %c0_i32_0 = arith.constant 0 : i32
    %c0_i32_1 = arith.constant 0 : i32
    return %c0_i32, %c0_i32_0 : i32, i32
  }
  func.func @transform_3(%arg0: i32) -> (i32, i32) {
    %c0_i32 = arith.constant 0 : i32
    %c0_i32_0 = arith.constant 0 : i32
    %c0_i32_1 = arith.constant 0 : i32
    return %c0_i32, %c0_i32_0 : i32, i32
  }
  func.func @transform_4(%arg0: i32) -> (i32, i32) {
    %c0_i32 = arith.constant 0 : i32
    %c0_i32_0 = arith.constant 0 : i32
    %c0_i32_1 = arith.constant 0 : i32
    return %c0_i32, %c0_i32_0 : i32, i32
  }
  func.func @transform_5(%arg0: i32) -> (i32, i32) {
    %c0_i32 = arith.constant 0 : i32
    %c0_i32_0 = arith.constant 0 : i32
    return %arg0, %c0_i32 : i32, i32
  }
}

</mosaic_0001>

<llo_original>
// kernel: tpu_custom_call.1
$region0: #{tpu_custom_call.1}
  #allocation0 [shape = 'u32[]', space=smem, size = 0x4, offset = 0x4, fixed_abs, tag = 'smem constant byte address 0x4 - core index']
  #allocation1 [shape = 'u32[72,128]{1,0:T(1,128)}', space=vmem, size = 0x9000, scoped, tag = 'internal scratch']
  %s0 = inlined_call_operand.hbm [shape: f32[16,128], index: 0, kind: input, shape index: {}]
  %s1 = inlined_call_operand.hbm [shape: f32[128,128], index: 1, kind: input, shape index: {}]
  %s2 = inlined_call_operand.vmem [shape: f32[1,128], index: 2, kind: input, shape index: {}]
  %s3 = inlined_call_operand.hbm [shape: f32[128,128], index: 3, kind: input, shape index: {}]
  %s4 = inlined_call_operand.vmem [shape: f32[1,128], index: 4, kind: input, shape index: {}]
  %s5 = inlined_call_operand.hbm [shape: f32[16,128], index: 5, kind: output, shape index: {}]
  %s6 = sld [smem:[#allocation0]]
  $region42: #{tpu_custom_call.1} parent=0
    _
  %s8 = ssub.s32 1, %s6
  %s9 = scalar_select 0, %s8, %s6
  $region1: #{tpu_custom_call.1} parent=0
    #allocation2 [shape = 'u8[8192]{0}', space=vmem, size = 0x2000, scoped, tag = 'input window, operand 0, single buffered']
    #allocation3 [shape = 's32[1]{0}', space=sflag, size = 0x4, scoped, tag = 'scoped memory for tpu_custom_call.1']
    #allocation4 [shape = 's32[1]{0}', space=sflag, size = 0x4, scoped, tag = 'scoped memory for tpu_custom_call.1']
    #allocation5 [shape = 'u8[65536]{0}', space=vmem, size = 0x10000, scoped, tag = 'input window, operand 1, single buffered']
    #allocation6 [shape = 's32[1]{0}', space=sflag, size = 0x4, scoped, tag = 'scoped memory for tpu_custom_call.1']
    #allocation7 [shape = 'u8[65536]{0}', space=vmem, size = 0x10000, scoped, tag = 'input window, operand 3, single buffered']
    #allocation8 [shape = 'u8[8192]{0}', space=vmem, size = 0x2000, scoped, tag = 'output window, operand 0, single buffered']
    %10 = vsyncpa [#allocation3], 0
    %11 = vsyncpa [#allocation6], 0
    %12 = vsyncpa [#allocation4], 0
    // Predicated region
    $region2: #{tpu_custom_call.1} parent=1 // pred_check
      _
    $region3: #{tpu_custom_call.1} parent=1 // pred_check_branch
      %14 = sbr.rel (0) target = $region5
    $region4: #{tpu_custom_call.1} parent=1 // pred_region
      %16 = vsyncadd [#allocation3], 0
      %s17 = sshll.u32 %s0, 4
      %s18 = int_to_ptr.hbm [resolvable:$true] %s17
      %s19 = sshll.u32 [#allocation2], 4
      %s20 = int_to_ptr.vmem [resolvable:$true] %s19
      %25 = dma.hbm_to_vmem [thread:$0]  %s18, 256, %s20, [#allocation3], 128, 128, 8
    $region5: #{tpu_custom_call.1} parent=1 // pred_fallthru
      _
    // Predicated region
    $region6: #{tpu_custom_call.1} parent=1 // pred_check
      _
    $region7: #{tpu_custom_call.1} parent=1 // pred_check_branch
      %27 = sbr.rel (0) target = $region9
    $region8: #{tpu_custom_call.1} parent=1 // pred_region
      %29 = vsyncadd [#allocation6], 0
      %s30 = sshll.u32 %s1, 4
      %s31 = int_to_ptr.hbm [resolvable:$true] %s30
      %s32 = sshll.u32 [#allocation5], 4
      %s33 = int_to_ptr.vmem [resolvable:$true] %s32
      %38 = dma.hbm_to_vmem [thread:$0]  %s31, 2048, %s33, [#allocation6], 128, 128, 8
    $region9: #{tpu_custom_call.1} parent=1 // pred_fallthru
      _
    // Predicated region
    $region10: #{tpu_custom_call.1} parent=1 // pred_check
      _
    $region11: #{tpu_custom_call.1} parent=1 // pred_check_branch
      %40 = sbr.rel (0) target = $region13
    $region12: #{tpu_custom_call.1} parent=1 // pred_region
      _
    $region13: #{tpu_custom_call.1} parent=1 // pred_fallthru
      _
    // Predicated region
    $region14: #{tpu_custom_call.1} parent=1 // pred_check
      _
    $region15: #{tpu_custom_call.1} parent=1 // pred_check_branch
      %42 = sbr.rel (0) target = $region17
    $region16: #{tpu_custom_call.1} parent=1 // pred_region
      %44 = vsyncadd [#allocation6], 0
      %s45 = sshll.u32 %s3, 4
      %s46 = int_to_ptr.hbm [resolvable:$true] %s45
      %s47 = sshll.u32 [#allocation7], 4
      %s48 = int_to_ptr.vmem [resolvable:$true] %s47
      %53 = dma.hbm_to_vmem [thread:$0]  %s46, 2048, %s48, [#allocation6], 128, 128, 8
    $region17: #{tpu_custom_call.1} parent=1 // pred_fallthru
      _
    // Predicated region
    $region18: #{tpu_custom_call.1} parent=1 // pred_check
      _
    $region19: #{tpu_custom_call.1} parent=1 // pred_check_branch
      %55 = sbr.rel (0) target = $region21
    $region20: #{tpu_custom_call.1} parent=1 // pred_region
      _
    $region21: #{tpu_custom_call.1} parent=1 // pred_fallthru
      _
    // Predicated region
    $region22: #{tpu_custom_call.1} parent=1 // pred_check
      _
    $region23: #{tpu_custom_call.1} parent=1 // pred_check_branch
      %57 = sbr.rel (0) target = $region25
    $region24: #{tpu_custom_call.1} parent=1 // pred_region
      %59 = dma.done [#allocation3], 256
    $region25: #{tpu_custom_call.1} parent=1 // pred_fallthru
      _
    // Predicated region
    $region26: #{tpu_custom_call.1} parent=1 // pred_check
      _
    $region27: #{tpu_custom_call.1} parent=1 // pred_check_branch
      %61 = sbr.rel (0) target = $region29
    $region28: #{tpu_custom_call.1} parent=1 // pred_region
      %63 = dma.done [#allocation6], 2048
    $region29: #{tpu_custom_call.1} parent=1 // pred_fallthru
      _
    // Predicated region
    $region30: #{tpu_custom_call.1} parent=1 // pred_check
      _
    $region31: #{tpu_custom_call.1} parent=1 // pred_check_branch
      %65 = sbr.rel (0) target = $region33
    $region32: #{tpu_custom_call.1} parent=1 // pred_region
      %67 = dma.done [#allocation6], 2048
    $region33: #{tpu_custom_call.1} parent=1 // pred_fallthru
      _
    %v68 = vld [vmem:[#allocation2] sm:$0xff]
    %v69 = vld [vmem:[#allocation2 + $0x8] sm:$0xff]
    %v70 = vld [vmem:[#allocation5] sm:$0xff]
    %v71 = vld [vmem:[#allocation5 + $0x8] sm:$0xff]
    %v72 = vld [vmem:[#allocation5 + $0x10] sm:$0xff]
    %v73 = vld [vmem:[#allocation5 + $0x18] sm:$0xff]
    %v74 = vld [vmem:[#allocation5 + $0x20] sm:$0xff]
    %v75 = vld [vmem:[#allocation5 + $0x28] sm:$0xff]
    %v76 = vld [vmem:[#allocation5 + $0x30] sm:$0xff]
    %v77 = vld [vmem:[#allocation5 + $0x38] sm:$0xff]
    %v78 = vld [vmem:[#allocation5 + $0x40] sm:$0xff]
    %v79 = vld [vmem:[#allocation5 + $0x48] sm:$0xff]
    %v80 = vld [vmem:[#allocation5 + $0x50] sm:$0xff]
    %v81 = vld [vmem:[#allocation5 + $0x58] sm:$0xff]
    %v82 = vld [vmem:[#allocation5 + $0x60] sm:$0xff]
    %v83 = vld [vmem:[#allocation5 + $0x68] sm:$0xff]
    %v84 = vld [vmem:[#allocation5 + $0x70] sm:$0xff]
    %v85 = vld [vmem:[#allocation5 + $0x78] sm:$0xff]
    %v86 = vld [vmem:[#allocation7] sm:$0xff]
    %v87 = vld [vmem:[#allocation7 + $0x8] sm:$0xff]
    %v88 = vld [vmem:[#allocation7 + $0x10] sm:$0xff]
    %v89 = vld [vmem:[#allocation7 + $0x18] sm:$0xff]
    %v90 = vld [vmem:[#allocation7 + $0x20] sm:$0xff]
    %v91 = vld [vmem:[#allocation7 + $0x28] sm:$0xff]
    %v92 = vld [vmem:[#allocation7 + $0x30] sm:$0xff]
    %v93 = vld [vmem:[#allocation7 + $0x38] sm:$0xff]
    %v94 = vld [vmem:[#allocation7 + $0x40] sm:$0xff]
    %v95 = vld [vmem:[#allocation7 + $0x48] sm:$0xff]
    %v96 = vld [vmem:[#allocation7 + $0x50] sm:$0xff]
    %v97 = vld [vmem:[#allocation7 + $0x58] sm:$0xff]
    %v98 = vld [vmem:[#allocation7 + $0x60] sm:$0xff]
    %v99 = vld [vmem:[#allocation7 + $0x68] sm:$0xff]
    %v100 = vld [vmem:[#allocation7 + $0x70] sm:$0xff]
    %v101 = vld [vmem:[#allocation7 + $0x78] sm:$0xff]
    %v102 = vld [vmem:[%s2] sm:$0x1]
    %v104 = vperm.slane %v102, 0
    %106 = vmatpush.msra.mxu0 %v85
    %107 = vmatpush.msra.mxu0 %v84
    %108 = vmatpush.msra.mxu0 %v83
    %109 = vmatpush.msra.mxu0 %v82
    %110 = vmatpush.msra.mxu0 %v81
    %111 = vmatpush.msra.mxu0 %v80
    %112 = vmatpush.msra.mxu0 %v79
    %113 = vmatpush.msra.mxu0 %v78
    %114 = vmatpush.msra.mxu0 %v77
    %115 = vmatpush.msra.mxu0 %v76
    %116 = vmatpush.msra.mxu0 %v75
    %117 = vmatpush.msra.mxu0 %v74
    %118 = vmatpush.msra.mxu0 %v73
    %119 = vmatpush.msra.mxu0 %v72
    %120 = vmatpush.msra.mxu0 %v71
    %121 = vmatpush.msra.mxu0 %v70
    %122 = vmatmul.f32.gmra.mxu0 %v68
    %v123 = vpop.f32.mrf.mxu0
    %v124 = vadd.f32 %v104, %v123
    %125 = vmatmul.f32.gmra.mxu0 %v69
    %v126 = vpop.f32.mrf.mxu0
    %v127 = vadd.f32 %v104, %v126
    %128 = vdwg.mxu0
    %v129 = vmax.f32 %v124, 0.0
    %v130 = vmax.f32 %v127, 0.0
    %v131 = vld [vmem:[%s4] sm:$0x1]
    %v133 = vperm.slane %v131, 0
    %135 = vmatpush.msra.mxu0 %v101
    %136 = vmatpush.msra.mxu0 %v100
    %137 = vmatpush.msra.mxu0 %v99
    %138 = vmatpush.msra.mxu0 %v98
    %139 = vmatpush.msra.mxu0 %v97
    %140 = vmatpush.msra.mxu0 %v96
    %141 = vmatpush.msra.mxu0 %v95
    %142 = vmatpush.msra.mxu0 %v94
    %143 = vmatpush.msra.mxu0 %v93
    %144 = vmatpush.msra.mxu0 %v92
    %145 = vmatpush.msra.mxu0 %v91
    %146 = vmatpush.msra.mxu0 %v90
    %147 = vmatpush.msra.mxu0 %v89
    %148 = vmatpush.msra.mxu0 %v88
    %149 = vmatpush.msra.mxu0 %v87
    %150 = vmatpush.msra.mxu0 %v86
    %151 = vmatmul.f32.gmra.mxu0 %v129
    %v152 = vpop.f32.mrf.mxu0
    %v153 = vadd.f32 %v133, %v152
    %154 = vmatmul.f32.gmra.mxu0 %v130
    %v155 = vpop.f32.mrf.mxu0
    %v156 = vadd.f32 %v133, %v155
    %157 = vdwg.mxu0
    %158 = vst [vmem:[#allocation8] sm:$0xff] %v153
    %159 = vst [vmem:[#allocation8 + $0x8] sm:$0xff] %v156
    // Predicated region
    $region34: #{tpu_custom_call.1} parent=1 // pred_check
      _
    $region35: #{tpu_custom_call.1} parent=1 // pred_check_branch
      %161 = sbr.rel (0) target = $region37
    $region36: #{tpu_custom_call.1} parent=1 // pred_region
      %163 = vsyncadd [#allocation4], 0
      %s164 = sshll.u32 [#allocation8], 4
      %s165 = int_to_ptr.vmem [resolvable:$true] %s164
      %s166 = sshll.u32 %s5, 4
      %s167 = int_to_ptr.hbm [resolvable:$true] %s166
      %172 = dma.vmem_to_hbm [thread:$0]  %s165, 256, %s167, [#allocation4], 128, 128, 8
    $region37: #{tpu_custom_call.1} parent=1 // pred_fallthru
      _
    // Predicated region
    $region38: #{tpu_custom_call.1} parent=1 // pred_check
      _
    $region39: #{tpu_custom_call.1} parent=1 // pred_check_branch
      %174 = sbr.rel (0) target = $region41
    $region40: #{tpu_custom_call.1} parent=1 // pred_region
      %176 = dma.done [#allocation4], 256
    $region41: #{tpu_custom_call.1} parent=1 // pred_fallthru
      _
    %177 = vsyncpa [#allocation3], 1
    %178 = vsyncpa [#allocation6], 1
    %179 = vsyncpa [#allocation4], 1

</llo_original>
